<compile_context>
chip_gen: v7x
topology: tpu7x:2x2x1
jax: 0.10.0
libtpu: 0.0.40
codegen_flags: <defaults>
</compile_context>

<pallas_src>
import jax
import jax.numpy as jnp
from jax.experimental import pallas as pl
from jax.experimental.pallas import tpu as pltpu


# ---------------------------------------------------------------------------
# Kernel
# ---------------------------------------------------------------------------
def encoder_kernel(x_ref, w1_ref, b1_ref, w2_ref, b2_ref, wh_ref, bh_ref,
                   out_ref):
    """One batch tile of the fused encoder MLP.

    x_ref  : (TILE_B, D_in)   bf16
    w1_ref : (D_in, H1)       bf16      b1_ref : (1, H1)      f32
    w2_ref : (H1, H2)         bf16      b2_ref : (1, H2)      f32
    wh_ref : (H2, 2*Z)        bf16      bh_ref : (1, 2*Z)     f32
    out_ref: (TILE_B, 2*Z)    f32   -> [:, :Z] = z_loc, [:, Z:] = exp(.) half
    """
    x = x_ref[...]

    # hidden1 = relu(x @ W1 + b1)   (bf16 operands, f32 accumulate)
    h1 = jnp.dot(x, w1_ref[...], preferred_element_type=jnp.float32)
    h1 = jnp.maximum(h1 + b1_ref[...], 0.0).astype(x.dtype)

    # hidden2 = relu(h1 @ W2 + b2)
    h2 = jnp.dot(h1, w2_ref[...], preferred_element_type=jnp.float32)
    h2 = jnp.maximum(h2 + b2_ref[...], 0.0).astype(x.dtype)

    # Fused head: [z_loc | pre_scale] = h2 @ [W3 | W4] + [b3 | b4]
    head = jnp.dot(h2, wh_ref[...], preferred_element_type=jnp.float32)
    head = head + bh_ref[...]

    # First Z columns pass through; last Z columns get exp().  Use a lane mask
    # + select instead of sub-vreg slicing/concat (exp of the loc half is free
    # EUP filler and harmlessly discarded by the select).
    z = head.shape[-1] // 2
    col = jax.lax.broadcasted_iota(jnp.int32, head.shape, dimension=1)
    out_ref[...] = jnp.where(col < z, head, jnp.exp(head))


# ---------------------------------------------------------------------------
# Wrapper
# ---------------------------------------------------------------------------
def _round_up(n, m):
    return ((n + m - 1) // m) * m


def encoder_forward(x, params, *, alph_size, seq_len, tile_b=256):
    """params: 8-tuple (w1,b1,w2,b2,w3,b3,w4,b4), weights stored (in, out),
    biases (1, out).  Returns (z_loc, z_scale) matching the PyTorch forward."""
    w1, b1, w2, b2, w3, b3, w4, b4 = params
    d_in = seq_len * alph_size
    z_dim = w3.shape[1]
    z2 = 2 * z_dim

    # Pack head weights: [W3 | W4], [b3 | b4]  -> one wide head matmul.
    wh = jnp.concatenate([w3, w4], axis=1)
    bh = jnp.concatenate([b3, b4], axis=1)

    # bf16 operands for the MXU; biases stay f32 (added post-accumulate).
    w1b = w1.astype(jnp.bfloat16)
    w2b = w2.astype(jnp.bfloat16)
    whb = wh.astype(jnp.bfloat16)
    b1f = b1.astype(jnp.float32)
    b2f = b2.astype(jnp.float32)
    bhf = bh.astype(jnp.float32)

    x2d = x.reshape(-1, d_in)
    B = x2d.shape[0]

    # Batch tile: multiple of 8 sublanes, capped for tiny batches, and small
    # enough (<= tile_b rows of f32 activations) to be VMEM-safe on v7x.
    tb = min(tile_b, _round_up(B, 8))
    Bp = _round_up(B, tb)
    if Bp != B:
        x2d = jnp.pad(x2d, ((0, Bp - B), (0, 0)))
    x2d = x2d.astype(jnp.bfloat16)

    grid = (Bp // tb,)

    def resident(shape):
        # Whole-array block, same block every grid step -> stays VMEM-resident.
        return pl.BlockSpec(shape, lambda i: (0, 0))

    out = pl.pallas_call(
        encoder_kernel,
        out_shape=jax.ShapeDtypeStruct((Bp, z2), jnp.float32),
        grid=grid,
        in_specs=[
            pl.BlockSpec((tb, d_in), lambda i: (i, 0)),   # x tile (pipelined)
            resident(w1b.shape), resident(b1f.shape),
            resident(w2b.shape), resident(b2f.shape),
            resident(whb.shape), resident(bhf.shape),
        ],
        out_specs=pl.BlockSpec((tb, z2), lambda i: (i, 0)),
        compiler_params=pltpu.CompilerParams(
            dimension_semantics=("parallel",)),
    )(x2d, w1b, b1f, w2b, b2f, whb, bhf)

    out = out[:B]
    return out[:, :z_dim], out[:, z_dim:]


# ---------------------------------------------------------------------------
# Params + references
# ---------------------------------------------------------------------------
def init_params(key, d_in, h1, h2, z_dim):
    """PyTorch-Linear-style init (uniform +/- 1/sqrt(fan_in)); weights (in,out)."""
    ks = jax.random.split(key, 8)

    def lin(kw, kb, fan_in, fan_out):
        bound = 1.0 / jnp.sqrt(jnp.float32(fan_in))
        w = jax.random.uniform(kw, (fan_in, fan_out), jnp.float32, -bound, bound)
        b = jax.random.uniform(kb, (1, fan_out), jnp.float32, -bound, bound)
        return w, b

    w1, b1 = lin(ks[0], ks[1], d_in, h1)
    w2, b2 = lin(ks[2], ks[3], h1, h2)
    w3, b3 = lin(ks[4], ks[5], h2, z_dim)
    w4, b4 = lin(ks[6], ks[7], h2, z_dim)
    return (w1, b1, w2, b2, w3, b3, w4, b4)


def encoder_reference_f32(x, params, *, alph_size, seq_len):
    """Plain-JAX full-f32 reference."""
    w1, b1, w2, b2, w3, b3, w4, b4 = params
    x2d = x.reshape(-1, seq_len * alph_size).astype(jnp.float32)
    h1 = jnp.maximum(x2d @ w1 + b1, 0.0)
    h2 = jnp.maximum(h1 @ w2 + b2, 0.0)
    return h2 @ w3 + b3, jnp.exp(h2 @ w4 + b4)


def encoder_reference_bf16(x, params, *, alph_size, seq_len):
    """Reference that mirrors the kernel's bf16-operand / f32-accumulate math."""
    w1, b1, w2, b2, w3, b3, w4, b4 = params
    z_dim = w3.shape[1]
    x2d = x.reshape(-1, seq_len * alph_size).astype(jnp.bfloat16)
    h1 = jnp.dot(x2d, w1.astype(jnp.bfloat16),
                 preferred_element_type=jnp.float32) + b1
    h1 = jnp.maximum(h1, 0.0).astype(jnp.bfloat16)
    h2 = jnp.dot(h1, w2.astype(jnp.bfloat16),
                 preferred_element_type=jnp.float32) + b2
    h2 = jnp.maximum(h2, 0.0).astype(jnp.bfloat16)
    wh = jnp.concatenate([w3, w4], axis=1).astype(jnp.bfloat16)
    bh = jnp.concatenate([b3, b4], axis=1)
    head = jnp.dot(h2, wh, preferred_element_type=jnp.float32) + bh
    return head[:, :z_dim], jnp.exp(head[:, z_dim:])


# ---------------------------------------------------------------------------
# Test
# ---------------------------------------------------------------------------
if __name__ == "__main__":
    # Small shapes consistent with the module: (batch, seq_len, alph_size)
    # flattened to (batch, seq_len*alph_size).
    batch, seq_len, alph_size = 4, 8, 4
    hidden_architecture = [64, 64]
    z_dim = 16
    d_in = seq_len * alph_size

    key = jax.random.PRNGKey(0)
    k_x, k_p = jax.random.split(key)
    x = jax.random.uniform(k_x, (batch, seq_len, alph_size), jnp.float32)
    params = init_params(k_p, d_in, hidden_architecture[0],
                         hidden_architecture[1], z_dim)

    z_loc, z_scale = encoder_forward(x, params,
                                     alph_size=alph_size, seq_len=seq_len)
    jax.block_until_ready((z_loc, z_scale))

    assert z_loc.shape == (batch, z_dim) and z_scale.shape == (batch, z_dim)
    assert bool(jnp.all(z_scale > 0))

    # Tight check vs a reference that mirrors the kernel's bf16/f32 math.
    ref_loc_b, ref_scale_b = encoder_reference_bf16(
        x, params, alph_size=alph_size, seq_len=seq_len)
    assert jnp.allclose(z_loc, ref_loc_b, atol=1e-3, rtol=1e-3)
    assert jnp.allclose(z_scale, ref_scale_b, atol=1e-3, rtol=1e-3)

    # Loose sanity check vs the full-f32 reference (bf16 operand rounding).
    ref_loc_f, ref_scale_f = encoder_reference_f32(
        x, params, alph_size=alph_size, seq_len=seq_len)
    assert jnp.allclose(z_loc, ref_loc_f, atol=5e-2, rtol=5e-2)
    assert jnp.allclose(z_scale, ref_scale_f, atol=5e-2, rtol=5e-2)

    print("KERNEL_OK")
</pallas_src>

<mosaic_0001>
module attributes {stable_mosaic.version = 11 : i64} {
  func.func @encoder_kernel(%arg0: i32, %arg1: memref<8x32xbf16, #tpu.memory_space<vmem>>, %arg2: memref<32x64xbf16, #tpu.memory_space<vmem>>, %arg3: memref<1x64xf32, #tpu.memory_space<vmem>>, %arg4: memref<64x64xbf16, #tpu.memory_space<vmem>>, %arg5: memref<1x64xf32, #tpu.memory_space<vmem>>, %arg6: memref<64x32xbf16, #tpu.memory_space<vmem>>, %arg7: memref<1x32xf32, #tpu.memory_space<vmem>>, %arg8: memref<8x32xf32, #tpu.memory_space<vmem>>) attributes {dimension_semantics = [#tpu.dimension_semantics<parallel>], iteration_bounds = array<i64: 1>, scalar_prefetch = 0 : i64, scratch_operands = 0 : i64, tpu.core_type = #tpu.core_type<tc>, window_params = [{transform_indices = @transform_0, window_bounds = array<i64: 8, 32>}, {pipeline_mode = #tpu.pipeline_mode<synchronous>, transform_indices = @transform_1, window_bounds = array<i64: 32, 64>}, {pipeline_mode = #tpu.pipeline_mode<synchronous>, transform_indices = @transform_2, window_bounds = array<i64: 1, 64>}, {pipeline_mode = #tpu.pipeline_mode<synchronous>, transform_indices = @transform_3, window_bounds = array<i64: 64, 64>}, {pipeline_mode = #tpu.pipeline_mode<synchronous>, transform_indices = @transform_4, window_bounds = array<i64: 1, 64>}, {pipeline_mode = #tpu.pipeline_mode<synchronous>, transform_indices = @transform_5, window_bounds = array<i64: 64, 32>}, {pipeline_mode = #tpu.pipeline_mode<synchronous>, transform_indices = @transform_6, window_bounds = array<i64: 1, 32>}, {transform_indices = @transform_7, window_bounds = array<i64: 8, 32>}]} {
    %c0 = arith.constant 0 : index
    %c0_0 = arith.constant 0 : index
    %0 = vector.load %arg1[%c0, %c0_0] : memref<8x32xbf16, #tpu.memory_space<vmem>>, vector<8x32xbf16>
    %c0_1 = arith.constant 0 : index
    %c0_2 = arith.constant 0 : index
    %1 = vector.load %arg2[%c0_1, %c0_2] : memref<32x64xbf16, #tpu.memory_space<vmem>>, vector<32x64xbf16>
    %cst = arith.constant dense<0.000000e+00> : vector<8x64xf32>
    %2 = tpu.matmul %0, %1, %cst {dimension_numbers = #tpu.dot_dimension_numbers<[1], [0], [0], [1], [0, 0, 1, 1], [], []>} : vector<8x32xbf16>, vector<32x64xbf16>, vector<8x64xf32> -> vector<8x64xf32>
    %c0_3 = arith.constant 0 : index
    %c0_4 = arith.constant 0 : index
    %3 = vector.load %arg3[%c0_3, %c0_4] : memref<1x64xf32, #tpu.memory_space<vmem>>, vector<1x64xf32>
    %4 = vector.broadcast %3 : vector<1x64xf32> to vector<8x64xf32>
    %5 = arith.addf %2, %4 : vector<8x64xf32>
    %cst_5 = arith.constant 0.000000e+00 : f32
    %6 = vector.broadcast %cst_5 : f32 to vector<8x64xf32>
    %7 = arith.maximumf %5, %6 : vector<8x64xf32>
    %8 = arith.truncf %7 : vector<8x64xf32> to vector<8x64xbf16>
    %c0_6 = arith.constant 0 : index
    %c0_7 = arith.constant 0 : index
    %9 = vector.load %arg4[%c0_6, %c0_7] : memref<64x64xbf16, #tpu.memory_space<vmem>>, vector<64x64xbf16>
    %cst_8 = arith.constant dense<0.000000e+00> : vector<8x64xf32>
    %10 = tpu.matmul %8, %9, %cst_8 {dimension_numbers = #tpu.dot_dimension_numbers<[1], [0], [0], [1], [0, 0, 1, 1], [], []>} : vector<8x64xbf16>, vector<64x64xbf16>, vector<8x64xf32> -> vector<8x64xf32>
    %c0_9 = arith.constant 0 : index
    %c0_10 = arith.constant 0 : index
    %11 = vector.load %arg5[%c0_9, %c0_10] : memref<1x64xf32, #tpu.memory_space<vmem>>, vector<1x64xf32>
    %12 = vector.broadcast %11 : vector<1x64xf32> to vector<8x64xf32>
    %13 = arith.addf %10, %12 : vector<8x64xf32>
    %cst_11 = arith.constant 0.000000e+00 : f32
    %14 = vector.broadcast %cst_11 : f32 to vector<8x64xf32>
    %15 = arith.maximumf %13, %14 : vector<8x64xf32>
    %16 = arith.truncf %15 : vector<8x64xf32> to vector<8x64xbf16>
    %c0_12 = arith.constant 0 : index
    %c0_13 = arith.constant 0 : index
    %17 = vector.load %arg6[%c0_12, %c0_13] : memref<64x32xbf16, #tpu.memory_space<vmem>>, vector<64x32xbf16>
    %cst_14 = arith.constant dense<0.000000e+00> : vector<8x32xf32>
    %18 = tpu.matmul %16, %17, %cst_14 {dimension_numbers = #tpu.dot_dimension_numbers<[1], [0], [0], [1], [0, 0, 1, 1], [], []>} : vector<8x64xbf16>, vector<64x32xbf16>, vector<8x32xf32> -> vector<8x32xf32>
    %c0_15 = arith.constant 0 : index
    %c0_16 = arith.constant 0 : index
    %19 = vector.load %arg7[%c0_15, %c0_16] : memref<1x32xf32, #tpu.memory_space<vmem>>, vector<1x32xf32>
    %20 = vector.broadcast %19 : vector<1x32xf32> to vector<8x32xf32>
    %21 = arith.addf %18, %20 : vector<8x32xf32>
    %22 = tpu.iota {dimensions = array<i32: 1>} : vector<8x32xi32>
    %c16_i32 = arith.constant 16 : i32
    %23 = vector.broadcast %c16_i32 : i32 to vector<8x32xi32>
    %24 = arith.cmpi slt, %22, %23 : vector<8x32xi32>
    %25 = math.exp %21 : vector<8x32xf32>
    %26 = arith.select %24, %21, %25 : vector<8x32xi1>, vector<8x32xf32>
    %c0_17 = arith.constant 0 : index
    %c0_18 = arith.constant 0 : index
    %27 = vector.load %arg8[%c0_17, %c0_18] : memref<8x32xf32, #tpu.memory_space<vmem>>, vector<8x32xf32>
    tpu.vector_store %arg8[%c0_17, %c0_18], %26 {strides = array<i32>} : memref<8x32xf32, #tpu.memory_space<vmem>>, vector<8x32xf32>,
    return
  }
  func.func @transform_0(%arg0: i32) -> (i32, i32) {
    %c0_i32 = arith.constant 0 : i32
    %c0_i32_0 = arith.constant 0 : i32
    return %arg0, %c0_i32 : i32, i32
  }
  func.func @transform_1(%arg0: i32) -> (i32, i32) {
    %c0_i32 = arith.constant 0 : i32
    %c0_i32_0 = arith.constant 0 : i32
    %c0_i32_1 = arith.constant 0 : i32
    return %c0_i32, %c0_i32_0 : i32, i32
  }
  func.func @transform_2(%arg0: i32) -> (i32, i32) {
    %c0_i32 = arith.constant 0 : i32
    %c0_i32_0 = arith.constant 0 : i32
    %c0_i32_1 = arith.constant 0 : i32
    return %c0_i32, %c0_i32_0 : i32, i32
  }
  func.func @transform_3(%arg0: i32) -> (i32, i32) {
    %c0_i32 = arith.constant 0 : i32
    %c0_i32_0 = arith.constant 0 : i32
    %c0_i32_1 = arith.constant 0 : i32
    return %c0_i32, %c0_i32_0 : i32, i32
  }
  func.func @transform_4(%arg0: i32) -> (i32, i32) {
    %c0_i32 = arith.constant 0 : i32
    %c0_i32_0 = arith.constant 0 : i32
    %c0_i32_1 = arith.constant 0 : i32
    return %c0_i32, %c0_i32_0 : i32, i32
  }
  func.func @transform_5(%arg0: i32) -> (i32, i32) {
    %c0_i32 = arith.constant 0 : i32
    %c0_i32_0 = arith.constant 0 : i32
    %c0_i32_1 = arith.constant 0 : i32
    return %c0_i32, %c0_i32_0 : i32, i32
  }
  func.func @transform_6(%arg0: i32) -> (i32, i32) {
    %c0_i32 = arith.constant 0 : i32
    %c0_i32_0 = arith.constant 0 : i32
    %c0_i32_1 = arith.constant 0 : i32
    return %c0_i32, %c0_i32_0 : i32, i32
  }
  func.func @transform_7(%arg0: i32) -> (i32, i32) {
    %c0_i32 = arith.constant 0 : i32
    %c0_i32_0 = arith.constant 0 : i32
    return %arg0, %c0_i32 : i32, i32
  }
}

</mosaic_0001>

<llo_original>
// kernel: tpu_custom_call.1
$region0: #{tpu_custom_call.1}
  #allocation0 [shape = 'u32[]', space=smem, size = 0x4, offset = 0x4, fixed_abs, tag = 'smem constant byte address 0x4 - core index']
  #allocation1 [shape = 'u32[144,128]{1,0:T(1,128)}', space=vmem, size = 0x12000, scoped, tag = 'internal scratch']
  %s0 = inlined_call_operand.hbm [shape: bf16[8,32], index: 0, kind: input, shape index: {}]
  %s1 = inlined_call_operand.vmem [shape: bf16[32,64], index: 1, kind: input, shape index: {}]
  %s2 = inlined_call_operand.vmem [shape: f32[1,64], index: 2, kind: input, shape index: {}]
  %s3 = inlined_call_operand.vmem [shape: bf16[64,64], index: 3, kind: input, shape index: {}]
  %s4 = inlined_call_operand.vmem [shape: f32[1,64], index: 4, kind: input, shape index: {}]
  %s5 = inlined_call_operand.vmem [shape: bf16[64,32], index: 5, kind: input, shape index: {}]
  %s6 = inlined_call_operand.vmem [shape: f32[1,32], index: 6, kind: input, shape index: {}]
  %s7 = inlined_call_operand.hbm [shape: f32[8,32], index: 7, kind: output, shape index: {}]
  %s8 = sld [smem:[#allocation0]]
  $region42: #{tpu_custom_call.1} parent=0
    _
  %s10 = ssub.s32 1, %s8
  %s11 = scalar_select 0, %s10, %s8
  $region1: #{tpu_custom_call.1} parent=0
    #allocation2 [shape = 'u8[2048]{0}', space=vmem, size = 0x800, scoped, tag = 'input window, operand 0, single buffered']
    #allocation3 [shape = 's32[1]{0}', space=sflag, size = 0x4, scoped, tag = 'scoped memory for tpu_custom_call.1']
    #allocation4 [shape = 's32[1]{0}', space=sflag, size = 0x4, scoped, tag = 'scoped memory for tpu_custom_call.1']
    #allocation5 [shape = 'u8[4096]{0}', space=vmem, size = 0x1000, scoped, tag = 'output window, operand 0, single buffered']
    %12 = vsyncpa [#allocation3], 0
    %13 = vsyncpa [#allocation4], 0
    // Predicated region
    $region2: #{tpu_custom_call.1} parent=1 // pred_check
      _
    $region3: #{tpu_custom_call.1} parent=1 // pred_check_branch
      %15 = sbr.rel (0) target = $region5
    $region4: #{tpu_custom_call.1} parent=1 // pred_region
      %s17 = ssub.s32 64, 64
      %18 = vsyncadd [#allocation3], %s17
      %s20 = sshll.u32 [#allocation2], 4
      %s21 = int_to_ptr.vmem [resolvable:$true] %s20
      %23 = dma.hbm_to_vmem [thread:$0]  %s0, 64, %s21, [#allocation3]
    $region5: #{tpu_custom_call.1} parent=1 // pred_fallthru
      _
    // Predicated region
    $region6: #{tpu_custom_call.1} parent=1 // pred_check
      _
    $region7: #{tpu_custom_call.1} parent=1 // pred_check_branch
      %25 = sbr.rel (0) target = $region9
    $region8: #{tpu_custom_call.1} parent=1 // pred_region
      _
    $region9: #{tpu_custom_call.1} parent=1 // pred_fallthru
      _
    // Predicated region
    $region10: #{tpu_custom_call.1} parent=1 // pred_check
      _
    $region11: #{tpu_custom_call.1} parent=1 // pred_check_branch
      %27 = sbr.rel (0) target = $region13
    $region12: #{tpu_custom_call.1} parent=1 // pred_region
      _
    $region13: #{tpu_custom_call.1} parent=1 // pred_fallthru
      _
    // Predicated region
    $region14: #{tpu_custom_call.1} parent=1 // pred_check
      _
    $region15: #{tpu_custom_call.1} parent=1 // pred_check_branch
      %29 = sbr.rel (0) target = $region17
    $region16: #{tpu_custom_call.1} parent=1 // pred_region
      _
    $region17: #{tpu_custom_call.1} parent=1 // pred_fallthru
      _
    // Predicated region
    $region18: #{tpu_custom_call.1} parent=1 // pred_check
      _
    $region19: #{tpu_custom_call.1} parent=1 // pred_check_branch
      %31 = sbr.rel (0) target = $region21
    $region20: #{tpu_custom_call.1} parent=1 // pred_region
      _
    $region21: #{tpu_custom_call.1} parent=1 // pred_fallthru
      _
    // Predicated region
    $region22: #{tpu_custom_call.1} parent=1 // pred_check
      _
    $region23: #{tpu_custom_call.1} parent=1 // pred_check_branch
      %33 = sbr.rel (0) target = $region25
    $region24: #{tpu_custom_call.1} parent=1 // pred_region
      _
    $region25: #{tpu_custom_call.1} parent=1 // pred_fallthru
      _
    // Predicated region
    $region26: #{tpu_custom_call.1} parent=1 // pred_check
      _
    $region27: #{tpu_custom_call.1} parent=1 // pred_check_branch
      %35 = sbr.rel (0) target = $region29
    $region28: #{tpu_custom_call.1} parent=1 // pred_region
      _
    $region29: #{tpu_custom_call.1} parent=1 // pred_fallthru
      _
    // Predicated region
    $region30: #{tpu_custom_call.1} parent=1 // pred_check
      _
    $region31: #{tpu_custom_call.1} parent=1 // pred_check_branch
      %37 = sbr.rel (0) target = $region33
    $region32: #{tpu_custom_call.1} parent=1 // pred_region
      %38 = dma.done [#allocation3], 64
    $region33: #{tpu_custom_call.1} parent=1 // pred_fallthru
      _
    %v40 = vld [vmem:[#allocation2] sm:$0xf]
    %v41 = vld [vmem:[%s1] sm:$0xf]
    %v42 = vld [vmem:[%s1 + $0x4] sm:$0xf]
    %v43 = vld [vmem:[%s1 + $0x8] sm:$0xf]
    %v44 = vld [vmem:[%s1 + $0xc] sm:$0xf]
    %v45 = vld [vmem:[%s2] sm:$0x1]
    %v47 = vlaneseq
    %v48 = vshrl.u32 %v47, 7
    %v49 = vsub.s32 0, %v48
    %v50 = vrot.slane %v45, %v49
    %v56 = vunpack.c.l.b16 %v41
    %v57 = vunpack.c.l.b16 %v42
    %v58 = vunpack.c.l.b16 %v43
    %v59 = vunpack.c.l.b16 %v44
    %v60 = vpack.c.b16 %v57, %v56
    %v61 = vpack.c.b16 %v59, %v58
    %vm64 = vcmask 261120
    %v66 = vsel %vm64, %v40, 0
    %68 = vmatprep.subr.bf16.mxu0 0
    %69 = vmatpush1.bf16.msra.mxu0 %v60
    %70 = vmatprep.subr.bf16.mxu0 0
    %71 = vmatpush1.bf16.msra.mxu0 %v61
    %72 = vmatprep.subr.bf16.mxu0 0
    %73 = vmatpush1.bf16.msra.mxu0 0
    %74 = vmatprep.subr.bf16.mxu0 0
    %75 = vmatpush1.bf16.msra.mxu0 0
    %76 = vmatprep.subr.bf16.mxu0 0
    %77 = vmatpush1.bf16.msra.mxu0 0
    %78 = vmatprep.subr.bf16.mxu0 0
    %79 = vmatpush1.bf16.msra.mxu0 0
    %80 = vmatprep.subr.bf16.mxu0 0
    %81 = vmatpush1.bf16.msra.mxu0 0
    %82 = vmatprep.subr.bf16.mxu0 0
    %83 = vmatpush1.bf16.msra.mxu0 0
    %84 = vmatprep.subr.bf16.mxu0 0
    %85 = vmatpush1.bf16.msra.mxu0 0
    %86 = vmatprep.subr.bf16.mxu0 0
    %87 = vmatpush1.bf16.msra.mxu0 0
    %88 = vmatprep.subr.bf16.mxu0 0
    %89 = vmatpush1.bf16.msra.mxu0 0
    %90 = vmatprep.subr.bf16.mxu0 0
    %91 = vmatpush1.bf16.msra.mxu0 0
    %92 = vmatprep.subr.bf16.mxu0 0
    %93 = vmatpush1.bf16.msra.mxu0 0
    %94 = vmatprep.subr.bf16.mxu0 0
    %95 = vmatpush1.bf16.msra.mxu0 0
    %96 = vmatprep.subr.bf16.mxu0 0
    %97 = vmatpush1.bf16.msra.mxu0 0
    %98 = vmatprep.subr.bf16.mxu0 0
    %99 = vmatpush1.bf16.msra.mxu0 0
    %100 = vmatprep.mubr.bf16.mxu0 0
    %101 = vmatmul.mubr.bf16.gmra.mrb[0].mxu0 %v66
    %v102 = vpop.f32.mrb[0].mxu0
    %v103 = vadd.f32 %v50, %v102
    %v104 = vpop.f32.mrb[0].mxu0
    %v105 = vpop.f32.mrb[0].mxu0
    %v106 = vpop.f32.mrb[0].mxu0
    %107 = vdwg.mxu0
    %v108 = vmax.f32 %v103, 0.0
    %v109 = vpack.c.bf16 %v108, %v108
    %v110 = vld [vmem:[%s3] sm:$0xf]
    %v111 = vld [vmem:[%s3 + $0x4] sm:$0xf]
    %v112 = vld [vmem:[%s3 + $0x8] sm:$0xf]
    %v113 = vld [vmem:[%s3 + $0xc] sm:$0xf]
    %v114 = vld [vmem:[%s3 + $0x10] sm:$0xf]
    %v115 = vld [vmem:[%s3 + $0x14] sm:$0xf]
    %v116 = vld [vmem:[%s3 + $0x18] sm:$0xf]
    %v117 = vld [vmem:[%s3 + $0x1c] sm:$0xf]
    %v118 = vld [vmem:[%s4] sm:$0x1]
    %v120 = vlaneseq
    %v121 = vshrl.u32 %v120, 7
    %v122 = vsub.s32 0, %v121
    %v123 = vrot.slane %v118, %v122
    %v133 = vunpack.c.l.b16 %v110
    %v134 = vunpack.c.l.b16 %v111
    %v135 = vunpack.c.l.b16 %v112
    %v136 = vunpack.c.l.b16 %v113
    %v137 = vunpack.c.l.b16 %v114
    %v138 = vunpack.c.l.b16 %v115
    %v139 = vunpack.c.l.b16 %v116
    %v140 = vunpack.c.l.b16 %v117
    %v141 = vpack.c.b16 %v134, %v133
    %v142 = vpack.c.b16 %v136, %v135
    %v143 = vpack.c.b16 %v138, %v137
    %v144 = vpack.c.b16 %v140, %v139
    %vm149 = vcmask 523264
    %v151 = vsel %vm149, %v109, 0
    %153 = vmatprep.subr.bf16.mxu0 0
    %154 = vmatpush1.bf16.msra.mxu0 %v141
    %155 = vmatprep.subr.bf16.mxu0 0
    %156 = vmatpush1.bf16.msra.mxu0 %v142
    %157 = vmatprep.subr.bf16.mxu0 0
    %158 = vmatpush1.bf16.msra.mxu0 %v143
    %159 = vmatprep.subr.bf16.mxu0 0
    %160 = vmatpush1.bf16.msra.mxu0 %v144
    %161 = vmatprep.subr.bf16.mxu0 0
    %162 = vmatpush1.bf16.msra.mxu0 0
    %163 = vmatprep.subr.bf16.mxu0 0
    %164 = vmatpush1.bf16.msra.mxu0 0
    %165 = vmatprep.subr.bf16.mxu0 0
    %166 = vmatpush1.bf16.msra.mxu0 0
    %167 = vmatprep.subr.bf16.mxu0 0
    %168 = vmatpush1.bf16.msra.mxu0 0
    %169 = vmatprep.subr.bf16.mxu0 0
    %170 = vmatpush1.bf16.msra.mxu0 0
    %171 = vmatprep.subr.bf16.mxu0 0
    %172 = vmatpush1.bf16.msra.mxu0 0
    %173 = vmatprep.subr.bf16.mxu0 0
    %174 = vmatpush1.bf16.msra.mxu0 0
    %175 = vmatprep.subr.bf16.mxu0 0
    %176 = vmatpush1.bf16.msra.mxu0 0
    %177 = vmatprep.subr.bf16.mxu0 0
    %178 = vmatpush1.bf16.msra.mxu0 0
    %179 = vmatprep.subr.bf16.mxu0 0
    %180 = vmatpush1.bf16.msra.mxu0 0
    %181 = vmatprep.subr.bf16.mxu0 0
    %182 = vmatpush1.bf16.msra.mxu0 0
    %183 = vmatprep.subr.bf16.mxu0 0
    %184 = vmatpush1.bf16.msra.mxu0 0
    %185 = vmatprep.mubr.bf16.mxu0 0
    %186 = vmatmul.mubr.bf16.gmra.mrb[0].mxu0 %v151
    %v187 = vpop.f32.mrb[0].mxu0
    %v188 = vadd.f32 %v123, %v187
    %v189 = vpop.f32.mrb[0].mxu0
    %v190 = vpop.f32.mrb[0].mxu0
    %v191 = vpop.f32.mrb[0].mxu0
    %192 = vdwg.mxu0
    %v193 = vmax.f32 %v188, 0.0
    %v194 = vpack.c.bf16 %v193, %v193
    %v195 = vld [vmem:[%s5] sm:$0xf]
    %v196 = vld [vmem:[%s5 + $0x4] sm:$0xf]
    %v197 = vld [vmem:[%s5 + $0x8] sm:$0xf]
    %v198 = vld [vmem:[%s5 + $0xc] sm:$0xf]
    %v199 = vld [vmem:[%s5 + $0x10] sm:$0xf]
    %v200 = vld [vmem:[%s5 + $0x14] sm:$0xf]
    %v201 = vld [vmem:[%s5 + $0x18] sm:$0xf]
    %v202 = vld [vmem:[%s5 + $0x1c] sm:$0xf]
    %v203 = vld [vmem:[%s6] sm:$0x1]
    %v205 = vlaneseq
    %v206 = vshrl.u32 %v205, 7
    %v207 = vsub.s32 0, %v206
    %v208 = vrot.slane %v203, %v207
    %v218 = vunpack.c.l.b16 %v195
    %v219 = vunpack.c.l.b16 %v196
    %v220 = vunpack.c.l.b16 %v197
    %v221 = vunpack.c.l.b16 %v198
    %v222 = vunpack.c.l.b16 %v199
    %v223 = vunpack.c.l.b16 %v200
    %v224 = vunpack.c.l.b16 %v201
    %v225 = vunpack.c.l.b16 %v202
    %v226 = vpack.c.b16 %v219, %v218
    %v227 = vpack.c.b16 %v221, %v220
    %v228 = vpack.c.b16 %v223, %v222
    %v229 = vpack.c.b16 %v225, %v224
    %v235 = vsel %vm149, %v194, 0
    %237 = vmatprep.subr.bf16.mxu0 0
    %238 = vmatpush1.bf16.msra.mxu0 %v226
    %239 = vmatprep.subr.bf16.mxu0 0
    %240 = vmatpush1.bf16.msra.mxu0 %v227
    %241 = vmatprep.subr.bf16.mxu0 0
    %242 = vmatpush1.bf16.msra.mxu0 %v228
    %243 = vmatprep.subr.bf16.mxu0 0
    %244 = vmatpush1.bf16.msra.mxu0 %v229
    %245 = vmatprep.subr.bf16.mxu0 0
    %246 = vmatpush1.bf16.msra.mxu0 0
    %247 = vmatprep.subr.bf16.mxu0 0
    %248 = vmatpush1.bf16.msra.mxu0 0
    %249 = vmatprep.subr.bf16.mxu0 0
    %250 = vmatpush1.bf16.msra.mxu0 0
    %251 = vmatprep.subr.bf16.mxu0 0
    %252 = vmatpush1.bf16.msra.mxu0 0
    %253 = vmatprep.subr.bf16.mxu0 0
    %254 = vmatpush1.bf16.msra.mxu0 0
    %255 = vmatprep.subr.bf16.mxu0 0
    %256 = vmatpush1.bf16.msra.mxu0 0
    %257 = vmatprep.subr.bf16.mxu0 0
    %258 = vmatpush1.bf16.msra.mxu0 0
    %259 = vmatprep.subr.bf16.mxu0 0
    %260 = vmatpush1.bf16.msra.mxu0 0
    %261 = vmatprep.subr.bf16.mxu0 0
    %262 = vmatpush1.bf16.msra.mxu0 0
    %263 = vmatprep.subr.bf16.mxu0 0
    %264 = vmatpush1.bf16.msra.mxu0 0
    %265 = vmatprep.subr.bf16.mxu0 0
    %266 = vmatpush1.bf16.msra.mxu0 0
    %267 = vmatprep.subr.bf16.mxu0 0
    %268 = vmatpush1.bf16.msra.mxu0 0
    %269 = vmatprep.mubr.bf16.mxu0 0
    %270 = vmatmul.mubr.bf16.gmra.mrb[0].mxu0 %v235
    %v271 = vpop.f32.mrb[0].mxu0
    %v272 = vadd.f32 %v208, %v271
    %v273 = vpop.f32.mrb[0].mxu0
    %v274 = vpop.f32.mrb[0].mxu0
    %v275 = vpop.f32.mrb[0].mxu0
    %276 = vdwg.mxu0
    %v277 = vlaneseq
    %v278 = vand.u32 %v277, 127
    %vm279 = vcmp.lt.s32.totalorder %v278, 16
    %v280 = vmul.f32 %v272, 1.442695
    %v281 = vpow.pop %v280
    %v282 = vsel %vm279, %v272, %v281
    %283 = vst.msk [vmem:[#allocation5] sm:$0xff] %vm64, %v282
    // Predicated region
    $region34: #{tpu_custom_call.1} parent=1 // pred_check
      _
    $region35: #{tpu_custom_call.1} parent=1 // pred_check_branch
      %285 = sbr.rel (0) target = $region37
    $region36: #{tpu_custom_call.1} parent=1 // pred_region
      %s287 = ssub.s32 128, 128
      %288 = vsyncadd [#allocation4], %s287
      %s290 = sshll.u32 [#allocation5], 4
      %s291 = int_to_ptr.vmem [resolvable:$true] %s290
      %293 = dma.vmem_to_hbm [thread:$0]  %s291, 128, %s7, [#allocation4]
    $region37: #{tpu_custom_call.1} parent=1 // pred_fallthru
      _
    // Predicated region
    $region38: #{tpu_custom_call.1} parent=1 // pred_check
      _
    $region39: #{tpu_custom_call.1} parent=1 // pred_check_branch
      %295 = sbr.rel (0) target = $region41
    $region40: #{tpu_custom_call.1} parent=1 // pred_region
      %296 = dma.done [#allocation4], 128
    $region41: #{tpu_custom_call.1} parent=1 // pred_fallthru
      _
    %297 = vsyncpa [#allocation3], 1
    %298 = vsyncpa [#allocation4], 1

</llo_original>
